<compile_context>
chip_gen: v7x
topology: tpu7x:2x2x1
jax: 0.10.0
libtpu: 0.0.40
codegen_flags: <defaults>
</compile_context>

<pallas_src>
import jax
import jax.numpy as jnp
from jax.experimental import pallas as pl
from jax.experimental.pallas import tpu as pltpu


def _round_up(n: int, m: int) -> int:
    return ((n + m - 1) // m) * m


def _make_mlp_kernel(num_layers: int):
    """Build a fused MLP kernel for `num_layers` Linear layers.

    Ref layout (batch on lanes):
      x_ref : (D, TB)                 input tile, batch on the lane axis
      per layer l: w_ref (out_l, in_l)  PyTorch (out, in) orientation
                   b_ref (out_l, 1)     f32, broadcasts along the batch lanes
      o_ref : (O, TB)                 output tile
    """

    def kernel(*refs):
        x_ref = refs[0]
        o_ref = refs[-1]
        wb_refs = refs[1:-1]

        h = x_ref[...]
        for l in range(num_layers):
            w_ref = wb_refs[2 * l]
            b_ref = wb_refs[2 * l + 1]
            # MXU matmul; accumulate in f32 regardless of input dtype.
            h = jnp.dot(w_ref[...], h.astype(w_ref.dtype),
                        preferred_element_type=jnp.float32)
            h = h + b_ref[...]            # bias broadcast over lanes (f32)
            if l < num_layers - 1:
                h = jnp.maximum(h, 0.0)   # ReLU on all but the last layer
        o_ref[...] = h.astype(o_ref.dtype)

    return kernel


def neural_net_forward(t, x, params, *, block_batch=512, compute_dtype=None):
    """Pallas forward pass of NeuralNet.

    t:      current time (unused by the module's forward; kept for parity).
    x:      (B, D) input, PyTorch row-major convention.
    params: list of (W, b) pairs per Linear layer, W in (out, in) orientation.
    """
    del t  # NeuralNet.forward ignores t
    if compute_dtype is None:
        compute_dtype = x.dtype

    B, D = x.shape
    num_layers = len(params)
    weights = [w.astype(compute_dtype) for (w, _) in params]
    biases = [b.reshape(-1, 1).astype(jnp.float32) for (_, b) in params]
    O = weights[-1].shape[0]
    out_dtype = x.dtype

    # Batch tile: multiple of 128 (lane width), as large as is useful.
    TB = min(block_batch, _round_up(B, 128))
    B_pad = _round_up(B, TB)
    n_tiles = B_pad // TB

    # Present batch as the lane (last) axis; zero-pad to the tile boundary.
    x_t = jnp.zeros((D, B_pad), compute_dtype).at[:, :B].set(
        x.T.astype(compute_dtype))

    # BlockSpecs: x/out tiled over the batch grid; weights & biases are full
    # arrays with constant block index -> DMA'd once, VMEM-resident.
    in_specs = [pl.BlockSpec((D, TB), lambda i: (0, i))]
    operands = [x_t]
    for w, b in zip(weights, biases):
        in_specs.append(pl.BlockSpec(w.shape, lambda i: (0, 0)))
        in_specs.append(pl.BlockSpec(b.shape, lambda i: (0, 0)))
        operands.append(w)
        operands.append(b)

    flops = 2 * B_pad * sum(w.shape[0] * w.shape[1] for w in weights)
    bytes_accessed = (
        x_t.size * x_t.dtype.itemsize
        + B_pad * O * jnp.dtype(out_dtype).itemsize
        + sum(a.size * a.dtype.itemsize for a in operands[1:]))

    out_t = pl.pallas_call(
        _make_mlp_kernel(num_layers),
        out_shape=jax.ShapeDtypeStruct((O, B_pad), out_dtype),
        grid=(n_tiles,),
        in_specs=in_specs,
        out_specs=pl.BlockSpec((O, TB), lambda i: (0, i)),
        compiler_params=pltpu.CompilerParams(
            dimension_semantics=("parallel",)),
        cost_estimate=pl.CostEstimate(
            flops=flops, transcendentals=0, bytes_accessed=bytes_accessed),
    )(*operands)

    # Back to PyTorch (B, O) convention; drop batch padding.
    return out_t[:, :B].T.astype(out_dtype)


def init_params(key, input_dim, hidden_dims, output_dim):
    """Deterministic synthetic init, weights in PyTorch (out, in) orientation."""
    dims = [input_dim] + list(hidden_dims) + [output_dim]
    scale = 0.1
    params = []
    for d_in, d_out in zip(dims[:-1], dims[1:]):
        kw, kb, key = jax.random.split(key, 3)
        params.append((
            scale * jax.random.normal(kw, (d_out, d_in), jnp.float32),
            scale * jax.random.normal(kb, (d_out,), jnp.float32),
        ))
    return params


def _reference(x, params):
    """Plain-JAX reference of NeuralNet.forward."""
    h = x
    for l, (w, b) in enumerate(params):
        h = h @ w.T + b
        if l < len(params) - 1:
            h = jnp.maximum(h, 0.0)
    return h


if __name__ == "__main__":
    batch, input_dim, hidden_dims, output_dim = 8, 16, [32, 32], 16

    key = jax.random.PRNGKey(0)
    kx, kp = jax.random.split(key)
    x = jax.random.normal(kx, (batch, input_dim), jnp.float32)
    t = jnp.zeros(())  # unused by forward; kept for signature parity
    params = init_params(kp, input_dim, hidden_dims, output_dim)

    ref = _reference(x, params)

    # f32 path (exact-precision check).
    out = jax.block_until_ready(neural_net_forward(t, x, params))
    assert out.shape == (batch, output_dim)
    assert jnp.allclose(out, ref, atol=1e-4, rtol=1e-4)

    # bf16 MXU-input path (v6e/v7x friendly; elementwise math stays f32).
    out_bf16 = jax.block_until_ready(
        neural_net_forward(t, x, params, compute_dtype=jnp.bfloat16))
    assert float(jnp.max(jnp.abs(out_bf16 - ref))) < 5e-2

    # Larger, non-multiple-of-128 batch exercising the tiled/pipelined grid.
    xb = jax.random.normal(jax.random.PRNGKey(1), (1000, input_dim), jnp.float32)
    outb = jax.block_until_ready(neural_net_forward(t, xb, params, block_batch=512))
    refb = _reference(xb, params)
    assert jnp.allclose(outb, refb, atol=1e-4, rtol=1e-4)

    print("KERNEL_OK")
</pallas_src>

<mosaic_0001>
module attributes {stable_mosaic.version = 11 : i64} {
  func.func @kernel(%arg0: i32, %arg1: memref<16x128xf32, #tpu.memory_space<vmem>>, %arg2: memref<32x16xf32, #tpu.memory_space<vmem>>, %arg3: memref<32x1xf32, #tpu.memory_space<vmem>>, %arg4: memref<32x32xf32, #tpu.memory_space<vmem>>, %arg5: memref<32x1xf32, #tpu.memory_space<vmem>>, %arg6: memref<16x32xf32, #tpu.memory_space<vmem>>, %arg7: memref<16x1xf32, #tpu.memory_space<vmem>>, %arg8: memref<16x128xf32, #tpu.memory_space<vmem>>) attributes {dimension_semantics = [#tpu.dimension_semantics<parallel>], iteration_bounds = array<i64: 1>, scalar_prefetch = 0 : i64, scratch_operands = 0 : i64, tpu.core_type = #tpu.core_type<tc>, window_params = [{transform_indices = @transform_0, window_bounds = array<i64: 16, 128>}, {pipeline_mode = #tpu.pipeline_mode<synchronous>, transform_indices = @transform_1, window_bounds = array<i64: 32, 16>}, {pipeline_mode = #tpu.pipeline_mode<synchronous>, transform_indices = @transform_2, window_bounds = array<i64: 32, 1>}, {pipeline_mode = #tpu.pipeline_mode<synchronous>, transform_indices = @transform_3, window_bounds = array<i64: 32, 32>}, {pipeline_mode = #tpu.pipeline_mode<synchronous>, transform_indices = @transform_4, window_bounds = array<i64: 32, 1>}, {pipeline_mode = #tpu.pipeline_mode<synchronous>, transform_indices = @transform_5, window_bounds = array<i64: 16, 32>}, {pipeline_mode = #tpu.pipeline_mode<synchronous>, transform_indices = @transform_6, window_bounds = array<i64: 16, 1>}, {transform_indices = @transform_7, window_bounds = array<i64: 16, 128>}]} {
    %c0 = arith.constant 0 : index
    %c0_0 = arith.constant 0 : index
    %0 = vector.load %arg1[%c0, %c0_0] : memref<16x128xf32, #tpu.memory_space<vmem>>, vector<16x128xf32>
    %c0_1 = arith.constant 0 : index
    %c0_2 = arith.constant 0 : index
    %1 = vector.load %arg2[%c0_1, %c0_2] : memref<32x16xf32, #tpu.memory_space<vmem>>, vector<32x16xf32>
    %cst = arith.constant dense<0.000000e+00> : vector<32x128xf32>
    %2 = tpu.matmul %1, %0, %cst {dimension_numbers = #tpu.dot_dimension_numbers<[1], [0], [0], [1], [0, 0, 1, 1], [], []>} : vector<32x16xf32>, vector<16x128xf32>, vector<32x128xf32> -> vector<32x128xf32>
    %c0_3 = arith.constant 0 : index
    %c0_4 = arith.constant 0 : index
    %3 = vector.load %arg3[%c0_3, %c0_4] : memref<32x1xf32, #tpu.memory_space<vmem>>, vector<32x1xf32>
    %4 = vector.broadcast %3 : vector<32x1xf32> to vector<32x128xf32>
    %5 = arith.addf %2, %4 : vector<32x128xf32>
    %cst_5 = arith.constant 0.000000e+00 : f32
    %6 = vector.broadcast %cst_5 : f32 to vector<32x128xf32>
    %7 = arith.maximumf %5, %6 : vector<32x128xf32>
    %c0_6 = arith.constant 0 : index
    %c0_7 = arith.constant 0 : index
    %8 = vector.load %arg4[%c0_6, %c0_7] : memref<32x32xf32, #tpu.memory_space<vmem>>, vector<32x32xf32>
    %cst_8 = arith.constant dense<0.000000e+00> : vector<32x128xf32>
    %9 = tpu.matmul %8, %7, %cst_8 {dimension_numbers = #tpu.dot_dimension_numbers<[1], [0], [0], [1], [0, 0, 1, 1], [], []>} : vector<32x32xf32>, vector<32x128xf32>, vector<32x128xf32> -> vector<32x128xf32>
    %c0_9 = arith.constant 0 : index
    %c0_10 = arith.constant 0 : index
    %10 = vector.load %arg5[%c0_9, %c0_10] : memref<32x1xf32, #tpu.memory_space<vmem>>, vector<32x1xf32>
    %11 = vector.broadcast %10 : vector<32x1xf32> to vector<32x128xf32>
    %12 = arith.addf %9, %11 : vector<32x128xf32>
    %cst_11 = arith.constant 0.000000e+00 : f32
    %13 = vector.broadcast %cst_11 : f32 to vector<32x128xf32>
    %14 = arith.maximumf %12, %13 : vector<32x128xf32>
    %c0_12 = arith.constant 0 : index
    %c0_13 = arith.constant 0 : index
    %15 = vector.load %arg6[%c0_12, %c0_13] : memref<16x32xf32, #tpu.memory_space<vmem>>, vector<16x32xf32>
    %cst_14 = arith.constant dense<0.000000e+00> : vector<16x128xf32>
    %16 = tpu.matmul %15, %14, %cst_14 {dimension_numbers = #tpu.dot_dimension_numbers<[1], [0], [0], [1], [0, 0, 1, 1], [], []>} : vector<16x32xf32>, vector<32x128xf32>, vector<16x128xf32> -> vector<16x128xf32>
    %c0_15 = arith.constant 0 : index
    %c0_16 = arith.constant 0 : index
    %17 = vector.load %arg7[%c0_15, %c0_16] : memref<16x1xf32, #tpu.memory_space<vmem>>, vector<16x1xf32>
    %18 = vector.broadcast %17 : vector<16x1xf32> to vector<16x128xf32>
    %19 = arith.addf %16, %18 : vector<16x128xf32>
    %c0_17 = arith.constant 0 : index
    %c0_18 = arith.constant 0 : index
    %20 = vector.load %arg8[%c0_17, %c0_18] : memref<16x128xf32, #tpu.memory_space<vmem>>, vector<16x128xf32>
    tpu.vector_store %arg8[%c0_17, %c0_18], %19 {strides = array<i32>} : memref<16x128xf32, #tpu.memory_space<vmem>>, vector<16x128xf32>,
    return
  }
  func.func @transform_0(%arg0: i32) -> (i32, i32) {
    %c0_i32 = arith.constant 0 : i32
    %c0_i32_0 = arith.constant 0 : i32
    return %c0_i32, %arg0 : i32, i32
  }
  func.func @transform_1(%arg0: i32) -> (i32, i32) {
    %c0_i32 = arith.constant 0 : i32
    %c0_i32_0 = arith.constant 0 : i32
    %c0_i32_1 = arith.constant 0 : i32
    return %c0_i32, %c0_i32_0 : i32, i32
  }
  func.func @transform_2(%arg0: i32) -> (i32, i32) {
    %c0_i32 = arith.constant 0 : i32
    %c0_i32_0 = arith.constant 0 : i32
    %c0_i32_1 = arith.constant 0 : i32
    return %c0_i32, %c0_i32_0 : i32, i32
  }
  func.func @transform_3(%arg0: i32) -> (i32, i32) {
    %c0_i32 = arith.constant 0 : i32
    %c0_i32_0 = arith.constant 0 : i32
    %c0_i32_1 = arith.constant 0 : i32
    return %c0_i32, %c0_i32_0 : i32, i32
  }
  func.func @transform_4(%arg0: i32) -> (i32, i32) {
    %c0_i32 = arith.constant 0 : i32
    %c0_i32_0 = arith.constant 0 : i32
    %c0_i32_1 = arith.constant 0 : i32
    return %c0_i32, %c0_i32_0 : i32, i32
  }
  func.func @transform_5(%arg0: i32) -> (i32, i32) {
    %c0_i32 = arith.constant 0 : i32
    %c0_i32_0 = arith.constant 0 : i32
    %c0_i32_1 = arith.constant 0 : i32
    return %c0_i32, %c0_i32_0 : i32, i32
  }
  func.func @transform_6(%arg0: i32) -> (i32, i32) {
    %c0_i32 = arith.constant 0 : i32
    %c0_i32_0 = arith.constant 0 : i32
    %c0_i32_1 = arith.constant 0 : i32
    return %c0_i32, %c0_i32_0 : i32, i32
  }
  func.func @transform_7(%arg0: i32) -> (i32, i32) {
    %c0_i32 = arith.constant 0 : i32
    %c0_i32_0 = arith.constant 0 : i32
    return %c0_i32, %arg0 : i32, i32
  }
}

</mosaic_0001>

<llo_original>
// kernel: tpu_custom_call.1
$region0: #{tpu_custom_call.1}
  #allocation0 [shape = 'u32[]', space=smem, size = 0x4, offset = 0x4, fixed_abs, tag = 'smem constant byte address 0x4 - core index']
  #allocation1 [shape = 'u32[144,128]{1,0:T(1,128)}', space=vmem, size = 0x12000, scoped, tag = 'internal scratch']
  %s0 = inlined_call_operand.vmem [shape: f32[16,128], index: 0, kind: input, shape index: {}]
  %s1 = inlined_call_operand.vmem [shape: f32[32,16], index: 1, kind: input, shape index: {}]
  %s2 = inlined_call_operand.vmem [shape: f32[32,1], index: 2, kind: input, shape index: {}]
  %s3 = inlined_call_operand.vmem [shape: f32[32,32], index: 3, kind: input, shape index: {}]
  %s4 = inlined_call_operand.vmem [shape: f32[32,1], index: 4, kind: input, shape index: {}]
  %s5 = inlined_call_operand.vmem [shape: f32[16,32], index: 5, kind: input, shape index: {}]
  %s6 = inlined_call_operand.vmem [shape: f32[16,1], index: 6, kind: input, shape index: {}]
  %s7 = inlined_call_operand.hbm [shape: f32[16,128], index: 7, kind: output, shape index: {}]
  %s8 = sld [smem:[#allocation0]]
  $region38: #{tpu_custom_call.1} parent=0
    _
  %s10 = ssub.s32 1, %s8
  %s11 = scalar_select 0, %s10, %s8
  $region1: #{tpu_custom_call.1} parent=0
    #allocation2 [shape = 'u8[8192]{0}', space=vmem, size = 0x2000, scoped, tag = 'output window, operand 0, single buffered']
    #allocation3 [shape = 's32[1]{0}', space=sflag, size = 0x4, scoped, tag = 'scoped memory for tpu_custom_call.1']
    %12 = vsyncpa [#allocation3], 0
    // Predicated region
    $region2: #{tpu_custom_call.1} parent=1 // pred_check
      _
    $region3: #{tpu_custom_call.1} parent=1 // pred_check_branch
      %14 = sbr.rel (0) target = $region5
    $region4: #{tpu_custom_call.1} parent=1 // pred_region
      _
    $region5: #{tpu_custom_call.1} parent=1 // pred_fallthru
      _
    // Predicated region
    $region6: #{tpu_custom_call.1} parent=1 // pred_check
      _
    $region7: #{tpu_custom_call.1} parent=1 // pred_check_branch
      %16 = sbr.rel (0) target = $region9
    $region8: #{tpu_custom_call.1} parent=1 // pred_region
      _
    $region9: #{tpu_custom_call.1} parent=1 // pred_fallthru
      _
    // Predicated region
    $region10: #{tpu_custom_call.1} parent=1 // pred_check
      _
    $region11: #{tpu_custom_call.1} parent=1 // pred_check_branch
      %18 = sbr.rel (0) target = $region13
    $region12: #{tpu_custom_call.1} parent=1 // pred_region
      _
    $region13: #{tpu_custom_call.1} parent=1 // pred_fallthru
      _
    // Predicated region
    $region14: #{tpu_custom_call.1} parent=1 // pred_check
      _
    $region15: #{tpu_custom_call.1} parent=1 // pred_check_branch
      %20 = sbr.rel (0) target = $region17
    $region16: #{tpu_custom_call.1} parent=1 // pred_region
      _
    $region17: #{tpu_custom_call.1} parent=1 // pred_fallthru
      _
    // Predicated region
    $region18: #{tpu_custom_call.1} parent=1 // pred_check
      _
    $region19: #{tpu_custom_call.1} parent=1 // pred_check_branch
      %22 = sbr.rel (0) target = $region21
    $region20: #{tpu_custom_call.1} parent=1 // pred_region
      _
    $region21: #{tpu_custom_call.1} parent=1 // pred_fallthru
      _
    // Predicated region
    $region22: #{tpu_custom_call.1} parent=1 // pred_check
      _
    $region23: #{tpu_custom_call.1} parent=1 // pred_check_branch
      %24 = sbr.rel (0) target = $region25
    $region24: #{tpu_custom_call.1} parent=1 // pred_region
      _
    $region25: #{tpu_custom_call.1} parent=1 // pred_fallthru
      _
    // Predicated region
    $region26: #{tpu_custom_call.1} parent=1 // pred_check
      _
    $region27: #{tpu_custom_call.1} parent=1 // pred_check_branch
      %26 = sbr.rel (0) target = $region29
    $region28: #{tpu_custom_call.1} parent=1 // pred_region
      _
    $region29: #{tpu_custom_call.1} parent=1 // pred_fallthru
      _
    %v27 = vld [vmem:[%s0] sm:$0xff]
    %v28 = vld [vmem:[%s0 + $0x8] sm:$0xff]
    %v29 = vld [vmem:[%s1] sm:$0xff]
    %v30 = vld [vmem:[%s1 + $0x8] sm:$0xff]
    %v31 = vld [vmem:[%s1 + $0x10] sm:$0xff]
    %v32 = vld [vmem:[%s1 + $0x18] sm:$0xff]
    %v33 = vld [vmem:[%s2] sm:$0xff]
    %v34 = vld [vmem:[%s2 + $0x8] sm:$0xff]
    %v35 = vld [vmem:[%s2 + $0x10] sm:$0xff]
    %v36 = vld [vmem:[%s2 + $0x18] sm:$0xff]
    %38 = vset.pattern.permute.xlu0 0
    %39 = vperm.xlu0 %38, %v33
    %v40 = vpop.permute.xlu0 %39
    %43 = vset.pattern.permute.xlu0 0
    %44 = vperm.xlu0 %43, %v34
    %v45 = vpop.permute.xlu0 %44
    %48 = vset.pattern.permute.xlu0 0
    %49 = vperm.xlu0 %48, %v35
    %v50 = vpop.permute.xlu0 %49
    %53 = vset.pattern.permute.xlu0 0
    %54 = vperm.xlu0 %53, %v36
    %v55 = vpop.permute.xlu0 %54
    %vm57 = vcmask 130048
    %v59 = vsel %vm57, %v29, 0
    %v62 = vsel %vm57, %v30, 0
    %v65 = vsel %vm57, %v31, 0
    %v68 = vsel %vm57, %v32, 0
    %70 = vmatprep.subr.mxu0 0.0
    %71 = vmatpush1.msra.mxu0 %v27
    %72 = vmatprep.subr.mxu0 0.0
    %73 = vmatpush1.msra.mxu0 %v28
    %74 = vmatprep.subr.mxu0 0.0
    %75 = vmatpush1.msra.mxu0 0.0
    %76 = vmatprep.subr.mxu0 0.0
    %77 = vmatpush1.msra.mxu0 0.0
    %78 = vmatprep.subr.mxu0 0.0
    %79 = vmatpush1.msra.mxu0 0.0
    %80 = vmatprep.subr.mxu0 0.0
    %81 = vmatpush1.msra.mxu0 0.0
    %82 = vmatprep.subr.mxu0 0.0
    %83 = vmatpush1.msra.mxu0 0.0
    %84 = vmatprep.subr.mxu0 0.0
    %85 = vmatpush1.msra.mxu0 0.0
    %86 = vmatprep.subr.mxu0 0.0
    %87 = vmatpush1.msra.mxu0 0.0
    %88 = vmatprep.subr.mxu0 0.0
    %89 = vmatpush1.msra.mxu0 0.0
    %90 = vmatprep.subr.mxu0 0.0
    %91 = vmatpush1.msra.mxu0 0.0
    %92 = vmatprep.subr.mxu0 0.0
    %93 = vmatpush1.msra.mxu0 0.0
    %94 = vmatprep.subr.mxu0 0.0
    %95 = vmatpush1.msra.mxu0 0.0
    %96 = vmatprep.subr.mxu0 0.0
    %97 = vmatpush1.msra.mxu0 0.0
    %98 = vmatprep.subr.mxu0 0.0
    %99 = vmatpush1.msra.mxu0 0.0
    %100 = vmatprep.subr.mxu0 0.0
    %101 = vmatpush1.msra.mxu0 0.0
    %102 = vmatprep.subr.mxu0 0.0
    %103 = vmatpush1.msra.mxu0 0.0
    %104 = vmatprep.subr.mxu0 0.0
    %105 = vmatpush1.msra.mxu0 0.0
    %106 = vmatprep.subr.mxu0 0.0
    %107 = vmatpush1.msra.mxu0 0.0
    %108 = vmatprep.subr.mxu0 0.0
    %109 = vmatpush1.msra.mxu0 0.0
    %110 = vmatprep.subr.mxu0 0.0
    %111 = vmatpush1.msra.mxu0 0.0
    %112 = vmatprep.subr.mxu0 0.0
    %113 = vmatpush1.msra.mxu0 0.0
    %114 = vmatprep.subr.mxu0 0.0
    %115 = vmatpush1.msra.mxu0 0.0
    %116 = vmatprep.subr.mxu0 0.0
    %117 = vmatpush1.msra.mxu0 0.0
    %118 = vmatprep.subr.mxu0 0.0
    %119 = vmatpush1.msra.mxu0 0.0
    %120 = vmatprep.subr.mxu0 0.0
    %121 = vmatpush1.msra.mxu0 0.0
    %122 = vmatprep.subr.mxu0 0.0
    %123 = vmatpush1.msra.mxu0 0.0
    %124 = vmatprep.subr.mxu0 0.0
    %125 = vmatpush1.msra.mxu0 0.0
    %126 = vmatprep.subr.mxu0 0.0
    %127 = vmatpush1.msra.mxu0 0.0
    %128 = vmatprep.subr.mxu0 0.0
    %129 = vmatpush1.msra.mxu0 0.0
    %130 = vmatprep.subr.mxu0 0.0
    %131 = vmatpush1.msra.mxu0 0.0
    %132 = vmatprep.subr.mxu0 0.0
    %133 = vmatpush1.msra.mxu0 0.0
    %134 = vmatprep.mubr.f32.mxu0 0.0
    %135 = vmatmul.mubr.f32.gmra.mrb[0].mxu0 %v59
    %v136 = vpop.f32.mrb[0].mxu0
    %v137 = vadd.f32 %v40, %v136
    %v138 = vpop.f32.mrb[0].mxu0
    %139 = vmatprep.mubr.f32.mxu0 0.0
    %140 = vmatmul.mubr.f32.gmra.mrb[0].mxu0 %v62
    %v141 = vpop.f32.mrb[0].mxu0
    %v142 = vadd.f32 %v45, %v141
    %v143 = vpop.f32.mrb[0].mxu0
    %144 = vmatprep.mubr.f32.mxu0 0.0
    %145 = vmatmul.mubr.f32.gmra.mrb[0].mxu0 %v65
    %v146 = vpop.f32.mrb[0].mxu0
    %v147 = vadd.f32 %v50, %v146
    %v148 = vpop.f32.mrb[0].mxu0
    %149 = vmatprep.mubr.f32.mxu0 0.0
    %150 = vmatmul.mubr.f32.gmra.mrb[0].mxu0 %v68
    %v151 = vpop.f32.mrb[0].mxu0
    %v152 = vadd.f32 %v55, %v151
    %v153 = vpop.f32.mrb[0].mxu0
    %154 = vdwg.mxu0
    %v155 = vmax.f32 %v137, 0.0
    %v156 = vmax.f32 %v142, 0.0
    %v157 = vmax.f32 %v147, 0.0
    %v158 = vmax.f32 %v152, 0.0
    %v159 = vld [vmem:[%s3] sm:$0xff]
    %v160 = vld [vmem:[%s3 + $0x8] sm:$0xff]
    %v161 = vld [vmem:[%s3 + $0x10] sm:$0xff]
    %v162 = vld [vmem:[%s3 + $0x18] sm:$0xff]
    %v163 = vld [vmem:[%s4] sm:$0xff]
    %v164 = vld [vmem:[%s4 + $0x8] sm:$0xff]
    %v165 = vld [vmem:[%s4 + $0x10] sm:$0xff]
    %v166 = vld [vmem:[%s4 + $0x18] sm:$0xff]
    %168 = vset.pattern.permute.xlu0 0
    %169 = vperm.xlu0 %168, %v163
    %v170 = vpop.permute.xlu0 %169
    %173 = vset.pattern.permute.xlu0 0
    %174 = vperm.xlu0 %173, %v164
    %v175 = vpop.permute.xlu0 %174
    %178 = vset.pattern.permute.xlu0 0
    %179 = vperm.xlu0 %178, %v165
    %v180 = vpop.permute.xlu0 %179
    %183 = vset.pattern.permute.xlu0 0
    %184 = vperm.xlu0 %183, %v166
    %v185 = vpop.permute.xlu0 %184
    %vm187 = vcmask 261120
    %v189 = vsel %vm187, %v159, 0
    %v192 = vsel %vm187, %v160, 0
    %v195 = vsel %vm187, %v161, 0
    %v198 = vsel %vm187, %v162, 0
    %200 = vmatprep.subr.mxu0 0.0
    %201 = vmatpush1.msra.mxu0 %v155
    %202 = vmatprep.subr.mxu0 0.0
    %203 = vmatpush1.msra.mxu0 %v156
    %204 = vmatprep.subr.mxu0 0.0
    %205 = vmatpush1.msra.mxu0 %v157
    %206 = vmatprep.subr.mxu0 0.0
    %207 = vmatpush1.msra.mxu0 %v158
    %208 = vmatprep.subr.mxu0 0.0
    %209 = vmatpush1.msra.mxu0 0.0
    %210 = vmatprep.subr.mxu0 0.0
    %211 = vmatpush1.msra.mxu0 0.0
    %212 = vmatprep.subr.mxu0 0.0
    %213 = vmatpush1.msra.mxu0 0.0
    %214 = vmatprep.subr.mxu0 0.0
    %215 = vmatpush1.msra.mxu0 0.0
    %216 = vmatprep.subr.mxu0 0.0
    %217 = vmatpush1.msra.mxu0 0.0
    %218 = vmatprep.subr.mxu0 0.0
    %219 = vmatpush1.msra.mxu0 0.0
    %220 = vmatprep.subr.mxu0 0.0
    %221 = vmatpush1.msra.mxu0 0.0
    %222 = vmatprep.subr.mxu0 0.0
    %223 = vmatpush1.msra.mxu0 0.0
    %224 = vmatprep.subr.mxu0 0.0
    %225 = vmatpush1.msra.mxu0 0.0
    %226 = vmatprep.subr.mxu0 0.0
    %227 = vmatpush1.msra.mxu0 0.0
    %228 = vmatprep.subr.mxu0 0.0
    %229 = vmatpush1.msra.mxu0 0.0
    %230 = vmatprep.subr.mxu0 0.0
    %231 = vmatpush1.msra.mxu0 0.0
    %232 = vmatprep.subr.mxu0 0.0
    %233 = vmatpush1.msra.mxu0 0.0
    %234 = vmatprep.subr.mxu0 0.0
    %235 = vmatpush1.msra.mxu0 0.0
    %236 = vmatprep.subr.mxu0 0.0
    %237 = vmatpush1.msra.mxu0 0.0
    %238 = vmatprep.subr.mxu0 0.0
    %239 = vmatpush1.msra.mxu0 0.0
    %240 = vmatprep.subr.mxu0 0.0
    %241 = vmatpush1.msra.mxu0 0.0
    %242 = vmatprep.subr.mxu0 0.0
    %243 = vmatpush1.msra.mxu0 0.0
    %244 = vmatprep.subr.mxu0 0.0
    %245 = vmatpush1.msra.mxu0 0.0
    %246 = vmatprep.subr.mxu0 0.0
    %247 = vmatpush1.msra.mxu0 0.0
    %248 = vmatprep.subr.mxu0 0.0
    %249 = vmatpush1.msra.mxu0 0.0
    %250 = vmatprep.subr.mxu0 0.0
    %251 = vmatpush1.msra.mxu0 0.0
    %252 = vmatprep.subr.mxu0 0.0
    %253 = vmatpush1.msra.mxu0 0.0
    %254 = vmatprep.subr.mxu0 0.0
    %255 = vmatpush1.msra.mxu0 0.0
    %256 = vmatprep.subr.mxu0 0.0
    %257 = vmatpush1.msra.mxu0 0.0
    %258 = vmatprep.subr.mxu0 0.0
    %259 = vmatpush1.msra.mxu0 0.0
    %260 = vmatprep.subr.mxu0 0.0
    %261 = vmatpush1.msra.mxu0 0.0
    %262 = vmatprep.subr.mxu0 0.0
    %263 = vmatpush1.msra.mxu0 0.0
    %264 = vmatprep.mubr.f32.mxu0 0.0
    %265 = vmatmul.mubr.f32.gmra.mrb[0].mxu0 %v189
    %v266 = vpop.f32.mrb[0].mxu0
    %v267 = vadd.f32 %v170, %v266
    %v268 = vpop.f32.mrb[0].mxu0
    %269 = vmatprep.mubr.f32.mxu0 0.0
    %270 = vmatmul.mubr.f32.gmra.mrb[0].mxu0 %v192
    %v271 = vpop.f32.mrb[0].mxu0
    %v272 = vadd.f32 %v175, %v271
    %v273 = vpop.f32.mrb[0].mxu0
    %274 = vmatprep.mubr.f32.mxu0 0.0
    %275 = vmatmul.mubr.f32.gmra.mrb[0].mxu0 %v195
    %v276 = vpop.f32.mrb[0].mxu0
    %v277 = vadd.f32 %v180, %v276
    %v278 = vpop.f32.mrb[0].mxu0
    %279 = vmatprep.mubr.f32.mxu0 0.0
    %280 = vmatmul.mubr.f32.gmra.mrb[0].mxu0 %v198
    %v281 = vpop.f32.mrb[0].mxu0
    %v282 = vadd.f32 %v185, %v281
    %v283 = vpop.f32.mrb[0].mxu0
    %284 = vdwg.mxu0
    %v285 = vmax.f32 %v267, 0.0
    %v286 = vmax.f32 %v272, 0.0
    %v287 = vmax.f32 %v277, 0.0
    %v288 = vmax.f32 %v282, 0.0
    %v289 = vld [vmem:[%s5] sm:$0xff]
    %v290 = vld [vmem:[%s5 + $0x8] sm:$0xff]
    %v291 = vld [vmem:[%s6] sm:$0xff]
    %v292 = vld [vmem:[%s6 + $0x8] sm:$0xff]
    %294 = vset.pattern.permute.xlu0 0
    %295 = vperm.xlu0 %294, %v291
    %v296 = vpop.permute.xlu0 %295
    %299 = vset.pattern.permute.xlu0 0
    %300 = vperm.xlu0 %299, %v292
    %v301 = vpop.permute.xlu0 %300
    %v304 = vsel %vm187, %v289, 0
    %v307 = vsel %vm187, %v290, 0
    %309 = vmatprep.subr.mxu0 0.0
    %310 = vmatpush1.msra.mxu0 %v285
    %311 = vmatprep.subr.mxu0 0.0
    %312 = vmatpush1.msra.mxu0 %v286
    %313 = vmatprep.subr.mxu0 0.0
    %314 = vmatpush1.msra.mxu0 %v287
    %315 = vmatprep.subr.mxu0 0.0
    %316 = vmatpush1.msra.mxu0 %v288
    %317 = vmatprep.subr.mxu0 0.0
    %318 = vmatpush1.msra.mxu0 0.0
    %319 = vmatprep.subr.mxu0 0.0
    %320 = vmatpush1.msra.mxu0 0.0
    %321 = vmatprep.subr.mxu0 0.0
    %322 = vmatpush1.msra.mxu0 0.0
    %323 = vmatprep.subr.mxu0 0.0
    %324 = vmatpush1.msra.mxu0 0.0
    %325 = vmatprep.subr.mxu0 0.0
    %326 = vmatpush1.msra.mxu0 0.0
    %327 = vmatprep.subr.mxu0 0.0
    %328 = vmatpush1.msra.mxu0 0.0
    %329 = vmatprep.subr.mxu0 0.0
    %330 = vmatpush1.msra.mxu0 0.0
    %331 = vmatprep.subr.mxu0 0.0
    %332 = vmatpush1.msra.mxu0 0.0
    %333 = vmatprep.subr.mxu0 0.0
    %334 = vmatpush1.msra.mxu0 0.0
    %335 = vmatprep.subr.mxu0 0.0
    %336 = vmatpush1.msra.mxu0 0.0
    %337 = vmatprep.subr.mxu0 0.0
    %338 = vmatpush1.msra.mxu0 0.0
    %339 = vmatprep.subr.mxu0 0.0
    %340 = vmatpush1.msra.mxu0 0.0
    %341 = vmatprep.subr.mxu0 0.0
    %342 = vmatpush1.msra.mxu0 0.0
    %343 = vmatprep.subr.mxu0 0.0
    %344 = vmatpush1.msra.mxu0 0.0
    %345 = vmatprep.subr.mxu0 0.0
    %346 = vmatpush1.msra.mxu0 0.0
    %347 = vmatprep.subr.mxu0 0.0
    %348 = vmatpush1.msra.mxu0 0.0
    %349 = vmatprep.subr.mxu0 0.0
    %350 = vmatpush1.msra.mxu0 0.0
    %351 = vmatprep.subr.mxu0 0.0
    %352 = vmatpush1.msra.mxu0 0.0
    %353 = vmatprep.subr.mxu0 0.0
    %354 = vmatpush1.msra.mxu0 0.0
    %355 = vmatprep.subr.mxu0 0.0
    %356 = vmatpush1.msra.mxu0 0.0
    %357 = vmatprep.subr.mxu0 0.0
    %358 = vmatpush1.msra.mxu0 0.0
    %359 = vmatprep.subr.mxu0 0.0
    %360 = vmatpush1.msra.mxu0 0.0
    %361 = vmatprep.subr.mxu0 0.0
    %362 = vmatpush1.msra.mxu0 0.0
    %363 = vmatprep.subr.mxu0 0.0
    %364 = vmatpush1.msra.mxu0 0.0
    %365 = vmatprep.subr.mxu0 0.0
    %366 = vmatpush1.msra.mxu0 0.0
    %367 = vmatprep.subr.mxu0 0.0
    %368 = vmatpush1.msra.mxu0 0.0
    %369 = vmatprep.subr.mxu0 0.0
    %370 = vmatpush1.msra.mxu0 0.0
    %371 = vmatprep.subr.mxu0 0.0
    %372 = vmatpush1.msra.mxu0 0.0
    %373 = vmatprep.mubr.f32.mxu0 0.0
    %374 = vmatmul.mubr.f32.gmra.mrb[0].mxu0 %v304
    %v375 = vpop.f32.mrb[0].mxu0
    %v376 = vadd.f32 %v296, %v375
    %v377 = vpop.f32.mrb[0].mxu0
    %378 = vmatprep.mubr.f32.mxu0 0.0
    %379 = vmatmul.mubr.f32.gmra.mrb[0].mxu0 %v307
    %v380 = vpop.f32.mrb[0].mxu0
    %v381 = vadd.f32 %v301, %v380
    %v382 = vpop.f32.mrb[0].mxu0
    %383 = vdwg.mxu0
    %384 = vst [vmem:[#allocation2] sm:$0xff] %v376
    %385 = vst [vmem:[#allocation2 + $0x8] sm:$0xff] %v381
    // Predicated region
    $region30: #{tpu_custom_call.1} parent=1 // pred_check
      _
    $region31: #{tpu_custom_call.1} parent=1 // pred_check_branch
      %387 = sbr.rel (0) target = $region33
    $region32: #{tpu_custom_call.1} parent=1 // pred_region
      %s389 = ssub.s32 256, 256
      %390 = vsyncadd [#allocation3], %s389
      %s391 = sshll.u32 [#allocation2], 4
      %s392 = int_to_ptr.vmem [resolvable:$true] %s391
      %397 = dma.vmem_to_hbm [thread:$0]  %s392, 256, %s7, [#allocation3], 128, 128, 8
    $region33: #{tpu_custom_call.1} parent=1 // pred_fallthru
      _
    // Predicated region
    $region34: #{tpu_custom_call.1} parent=1 // pred_check
      _
    $region35: #{tpu_custom_call.1} parent=1 // pred_check_branch
      %399 = sbr.rel (0) target = $region37
    $region36: #{tpu_custom_call.1} parent=1 // pred_region
      %400 = dma.done [#allocation3], 256
    $region37: #{tpu_custom_call.1} parent=1 // pred_fallthru
      _
    %401 = vsyncpa [#allocation3], 1

</llo_original>
